<compile_context>
chip_gen: v7x
topology: tpu7x:2x2x1
jax: 0.10.0
libtpu: 0.0.40
codegen_flags: <defaults>
</compile_context>

<pallas_src>
import jax
import jax.numpy as jnp
from jax.experimental import pallas as pl
from jax.experimental.pallas import tpu as pltpu  # noqa: F401  (kept per template)

LANE = 128


def _round_up(n, m):
    return ((n + m - 1) // m) * m


def _layout(O, H):
    """Packed-slab layout: [out (lanes [0:O)) | h (at h_off) | c | zero pad]."""
    h_off = _round_up(O, 32)                       # 32 for O=8
    width = max(LANE, _round_up(h_off + 2 * H, LANE))
    return h_off, width


# --------------------------------------------------------------------------- #
# Kernel
# --------------------------------------------------------------------------- #
def _lstm_step_kernel(x_ref, state_ref, w_ih_ref, w_hh_ref, b_gates_ref,
                      w_out_ref, b_out_ref, out_ref):
    H = w_hh_ref.shape[0]           # (H, 4H)
    h_off = w_out_ref.shape[1]      # lane offset of h in the packed slab
    c_off = h_off + H
    width = out_ref.shape[1]
    B = x_ref.shape[0]

    x = x_ref[...]                  # (B, I)
    state = state_ref[...]          # (B, width) packed [.. | h | c | ..]
    h = state[:, h_off:c_off]       # (B, H)
    c = state[:, c_off:c_off + H]   # (B, H)

    # All four gates from two small MXU dots (f32 accumulate).  The 'g'
    # columns of the weights/bias were pre-scaled by 2 in prepare_params, so a
    # SINGLE sigmoid pass over the full gates vreg yields i/f/o directly and
    # g via tanh(z) = 2*sigmoid(2z) - 1.
    gates = (jnp.dot(x, w_ih_ref[...], preferred_element_type=jnp.float32)
             + jnp.dot(h, w_hh_ref[...], preferred_element_type=jnp.float32)
             + b_gates_ref[...])                           # (B, 4H)
    act = jax.nn.sigmoid(gates)                            # one EUP pass

    i_g = act[:, 0 * H:1 * H]
    f_g = act[:, 1 * H:2 * H]
    g_g = 2.0 * act[:, 2 * H:3 * H] - 1.0                  # == tanh(gate_g)
    o_g = act[:, 3 * H:4 * H]

    c_new = f_g * c + i_g * g_g
    h_new = o_g * jnp.tanh(c_new)

    # Output head (weights zero-padded to h_off lanes).  Padded head lanes
    # hold sigmoid(0)=0.5; consumers must slice [:, :O] (done in the wrapper).
    head = jax.nn.sigmoid(
        jnp.dot(h_new, w_out_ref[...], preferred_element_type=jnp.float32)
        + b_out_ref[...])                                  # (B, h_off)

    # Assemble the packed slab in vregs and do ONE full-lane (unmasked) store.
    pieces = [head, h_new, c_new]
    pad = width - (c_off + H)
    if pad:
        pieces.append(jnp.zeros((B, pad), jnp.float32))
    out_ref[...] = jnp.concatenate(pieces, axis=1)


# --------------------------------------------------------------------------- #
# One-time parameter / state preparation (init time, not per forward call)
# --------------------------------------------------------------------------- #
def prepare_params(w_ih, w_hh, b_ih, b_hh, w_out, b_out):
    """w_ih: (4H, I)  w_hh: (4H, H)  b_ih/b_hh: (4H,)  w_out: (O, H)  b_out: (O,)

    Returns (w_ih_t, w_hh_t, b_gates, w_out_p, b_out_p):
      w_ih_t : (I, 4H)     transposed, 'g' columns scaled by 2
      w_hh_t : (H, 4H)     transposed, 'g' columns scaled by 2
      b_gates: (1, 4H)     pre-summed bias, 'g' slice scaled by 2
      w_out_p: (H, h_off)  transposed output weights, zero-padded
      b_out_p: (1, h_off)
    """
    four_h, _ = w_ih.shape
    H = four_h // 4
    O = w_out.shape[0]
    h_off, _ = _layout(O, H)

    g_scale = jnp.ones((4 * H,), jnp.float32).at[2 * H:3 * H].set(2.0)
    w_ih_t = (w_ih.T * g_scale).astype(jnp.float32)
    w_hh_t = (w_hh.T * g_scale).astype(jnp.float32)
    b_gates = ((b_ih + b_hh) * g_scale).reshape(1, 4 * H).astype(jnp.float32)
    w_out_p = jnp.zeros((H, h_off), jnp.float32).at[:, :O].set(w_out.T)
    b_out_p = jnp.zeros((1, h_off), jnp.float32).at[:, :O].set(b_out)
    return w_ih_t, w_hh_t, b_gates, w_out_p, b_out_p


def pack_state(hx, cx, O):
    """Pack (hx, cx) into the lane-dense slab layout used by the kernel."""
    B, H = hx.shape
    h_off, width = _layout(O, H)
    state = jnp.zeros((B, width), jnp.float32)
    state = state.at[:, h_off:h_off + H].set(hx.astype(jnp.float32))
    state = state.at[:, h_off + H:h_off + 2 * H].set(cx.astype(jnp.float32))
    return state


def unpack_outputs(packed, O, H):
    """Slice (out, h_new, c_new) from the packed slab."""
    h_off, _ = _layout(O, H)
    return (packed[:, :O],
            packed[:, h_off:h_off + H],
            packed[:, h_off + H:h_off + 2 * H])


# --------------------------------------------------------------------------- #
# Forward (one LSTMCell step + sigmoid(Linear)), packed in/out state
# --------------------------------------------------------------------------- #
def _lstm_forward(x, state, w_ih_t, w_hh_t, b_gates, w_out_p, b_out_p):
    """Returns the packed (B, width) slab [out | h_new | c_new | pad].

    `state` is DONATED and aliased onto the output: do not reuse it after the
    call.  The returned slab is directly the `state` of the next step.
    """
    B, I = x.shape
    H = w_hh_t.shape[0]
    width = state.shape[1]
    h_off = w_out_p.shape[1]

    full = lambda shape: pl.BlockSpec(shape, lambda: (0,) * len(shape))

    packed = pl.pallas_call(
        _lstm_step_kernel,
        grid=(),
        in_specs=[
            full((B, I)),            # x
            full((B, width)),        # packed state (h, c)
            full((I, 4 * H)),        # W_ih^T (g-scaled)
            full((H, 4 * H)),        # W_hh^T (g-scaled)
            full((1, 4 * H)),        # fused gate bias (g-scaled)
            full((H, h_off)),        # output head weights (lane-padded)
            full((1, h_off)),        # output head bias (lane-padded)
        ],
        out_specs=full((B, width)),
        out_shape=jax.ShapeDtypeStruct((B, width), jnp.float32),
        # In-place state update: packed state buffer is reused for the output.
        input_output_aliases={1: 0},
    )(x, state, w_ih_t, w_hh_t, b_gates, w_out_p, b_out_p)
    return packed


# jit-level donation of the packed state makes the pallas alias real (no
# defensive copy inserted by XLA).
lstm_forward = jax.jit(_lstm_forward, donate_argnums=(1,))


# --------------------------------------------------------------------------- #
# Pure-JAX reference (PyTorch semantics)
# --------------------------------------------------------------------------- #
def reference_forward(x, hx, cx, w_ih, w_hh, b_ih, b_hh, w_out, b_out):
    gates = x @ w_ih.T + b_ih + hx @ w_hh.T + b_hh
    H = hx.shape[1]
    i = jax.nn.sigmoid(gates[:, 0 * H:1 * H])
    f = jax.nn.sigmoid(gates[:, 1 * H:2 * H])
    g = jnp.tanh(gates[:, 2 * H:3 * H])
    o = jax.nn.sigmoid(gates[:, 3 * H:4 * H])
    c_new = f * cx + i * g
    h_new = o * jnp.tanh(c_new)
    return jax.nn.sigmoid(h_new @ w_out.T + b_out), h_new, c_new


if __name__ == "__main__":
    # Small shapes consistent with the module.  (B=2 matches spec; batching to
    # a multiple of 8 would fill sublanes for free but is a caller decision.)
    batch_size = 2
    input_size = 16
    controller_size = 32
    output_size = 8
    seq = 1  # forward consumes in_data[0]

    key = jax.random.PRNGKey(0)
    ks = jax.random.split(key, 10)

    s = 1.0 / jnp.sqrt(controller_size)
    w_ih = jax.random.uniform(ks[0], (4 * controller_size, input_size),
                              minval=-s, maxval=s, dtype=jnp.float32)
    w_hh = jax.random.uniform(ks[1], (4 * controller_size, controller_size),
                              minval=-s, maxval=s, dtype=jnp.float32)
    b_ih = jax.random.uniform(ks[2], (4 * controller_size,),
                              minval=-s, maxval=s, dtype=jnp.float32)
    b_hh = jax.random.uniform(ks[3], (4 * controller_size,),
                              minval=-s, maxval=s, dtype=jnp.float32)
    w_out = jax.random.uniform(ks[4], (output_size, controller_size),
                               minval=-s, maxval=s, dtype=jnp.float32)
    b_out = jax.random.uniform(ks[5], (output_size,),
                               minval=-s, maxval=s, dtype=jnp.float32)

    # module state (self.hx / self.cx = torch.randn(...))
    hx = jax.random.normal(ks[6], (batch_size, controller_size), jnp.float32)
    cx = jax.random.normal(ks[7], (batch_size, controller_size), jnp.float32)

    # input with leading sequence axis; forward consumes in_data[0]
    in_data = jax.random.normal(ks[8], (seq, batch_size, input_size), jnp.float32)
    x = in_data[0]

    # Reference (pure JAX).  hx/cx arrays themselves are never donated (only
    # the packed state buffer is), so ordering does not matter here.
    out_ref_, h_ref_, c_ref_ = reference_forward(x, hx, cx, w_ih, w_hh,
                                                 b_ih, b_hh, w_out, b_out)

    # One-time preparation, then the fused Pallas step.
    params = prepare_params(w_ih, w_hh, b_ih, b_hh, w_out, b_out)
    state = pack_state(hx, cx, output_size)          # donated into lstm_forward
    packed = lstm_forward(x, state, *params)
    out, h_new, c_new = unpack_outputs(packed, output_size, controller_size)
    jax.block_until_ready((out, h_new, c_new))

    assert jnp.allclose(out, out_ref_, atol=1e-5, rtol=1e-5)
    assert jnp.allclose(h_new, h_ref_, atol=1e-5, rtol=1e-5)
    assert jnp.allclose(c_new, c_ref_, atol=1e-5, rtol=1e-5)

    print("KERNEL_OK")
</pallas_src>

<mosaic_0001>
module attributes {stable_mosaic.version = 11 : i64} {
  func.func @_lstm_step_kernel(%arg0: memref<2x16xf32, #tpu.memory_space<vmem>>, %arg1: memref<2x128xf32, #tpu.memory_space<vmem>>, %arg2: memref<16x128xf32, #tpu.memory_space<vmem>>, %arg3: memref<32x128xf32, #tpu.memory_space<vmem>>, %arg4: memref<1x128xf32, #tpu.memory_space<vmem>>, %arg5: memref<32x32xf32, #tpu.memory_space<vmem>>, %arg6: memref<1x32xf32, #tpu.memory_space<vmem>>, %arg7: memref<2x128xf32, #tpu.memory_space<vmem>>) attributes {dimension_semantics = [], scalar_prefetch = 0 : i64, scratch_operands = 0 : i64, tpu.core_type = #tpu.core_type<tc>} {
    %c0 = arith.constant 0 : index
    %c0_0 = arith.constant 0 : index
    %0 = vector.load %arg0[%c0, %c0_0] : memref<2x16xf32, #tpu.memory_space<vmem>>, vector<2x16xf32>
    %c0_1 = arith.constant 0 : index
    %c0_2 = arith.constant 0 : index
    %1 = vector.load %arg1[%c0_1, %c0_2] : memref<2x128xf32, #tpu.memory_space<vmem>>, vector<2x128xf32>
    %2 = vector.extract_strided_slice %1 {offsets = [0, 32], sizes = [2, 32], strides = [1, 1]} : vector<2x128xf32> to vector<2x32xf32>
    %3 = vector.extract_strided_slice %1 {offsets = [0, 64], sizes = [2, 32], strides = [1, 1]} : vector<2x128xf32> to vector<2x32xf32>
    %c0_3 = arith.constant 0 : index
    %c0_4 = arith.constant 0 : index
    %4 = vector.load %arg2[%c0_3, %c0_4] : memref<16x128xf32, #tpu.memory_space<vmem>>, vector<16x128xf32>
    %cst = arith.constant dense<0.000000e+00> : vector<2x128xf32>
    %5 = tpu.matmul %0, %4, %cst {dimension_numbers = #tpu.dot_dimension_numbers<[1], [0], [0], [1], [0, 0, 1, 1], [], []>} : vector<2x16xf32>, vector<16x128xf32>, vector<2x128xf32> -> vector<2x128xf32>
    %c0_5 = arith.constant 0 : index
    %c0_6 = arith.constant 0 : index
    %6 = vector.load %arg3[%c0_5, %c0_6] : memref<32x128xf32, #tpu.memory_space<vmem>>, vector<32x128xf32>
    %cst_7 = arith.constant dense<0.000000e+00> : vector<2x128xf32>
    %7 = tpu.matmul %2, %6, %cst_7 {dimension_numbers = #tpu.dot_dimension_numbers<[1], [0], [0], [1], [0, 0, 1, 1], [], []>} : vector<2x32xf32>, vector<32x128xf32>, vector<2x128xf32> -> vector<2x128xf32>
    %8 = arith.addf %5, %7 : vector<2x128xf32>
    %c0_8 = arith.constant 0 : index
    %c0_9 = arith.constant 0 : index
    %9 = vector.load %arg4[%c0_8, %c0_9] : memref<1x128xf32, #tpu.memory_space<vmem>>, vector<1x128xf32>
    %10 = vector.broadcast %9 : vector<1x128xf32> to vector<2x128xf32>
    %11 = arith.addf %8, %10 : vector<2x128xf32>
    %12 = arith.negf %11 : vector<2x128xf32>
    %13 = math.exp %12 : vector<2x128xf32>
    %cst_10 = arith.constant 1.000000e+00 : f32
    %14 = vector.broadcast %cst_10 : f32 to vector<2x128xf32>
    %15 = arith.addf %14, %13 : vector<2x128xf32>
    %16 = arith.divf %14, %15 : vector<2x128xf32>
    %17 = vector.extract_strided_slice %16 {offsets = [0, 0], sizes = [2, 32], strides = [1, 1]} : vector<2x128xf32> to vector<2x32xf32>
    %18 = vector.extract_strided_slice %16 {offsets = [0, 32], sizes = [2, 32], strides = [1, 1]} : vector<2x128xf32> to vector<2x32xf32>
    %19 = vector.extract_strided_slice %16 {offsets = [0, 64], sizes = [2, 32], strides = [1, 1]} : vector<2x128xf32> to vector<2x32xf32>
    %cst_11 = arith.constant 2.000000e+00 : f32
    %20 = vector.broadcast %cst_11 : f32 to vector<2x32xf32>
    %21 = arith.mulf %20, %19 : vector<2x32xf32>
    %cst_12 = arith.constant 1.000000e+00 : f32
    %22 = vector.broadcast %cst_12 : f32 to vector<2x32xf32>
    %23 = arith.subf %21, %22 : vector<2x32xf32>
    %24 = vector.extract_strided_slice %16 {offsets = [0, 96], sizes = [2, 32], strides = [1, 1]} : vector<2x128xf32> to vector<2x32xf32>
    %25 = arith.mulf %18, %3 : vector<2x32xf32>
    %26 = arith.mulf %17, %23 : vector<2x32xf32>
    %27 = arith.addf %25, %26 : vector<2x32xf32>
    %28 = math.tanh %27 : vector<2x32xf32>
    %29 = arith.mulf %24, %28 : vector<2x32xf32>
    %c0_13 = arith.constant 0 : index
    %c0_14 = arith.constant 0 : index
    %30 = vector.load %arg5[%c0_13, %c0_14] : memref<32x32xf32, #tpu.memory_space<vmem>>, vector<32x32xf32>
    %cst_15 = arith.constant dense<0.000000e+00> : vector<2x32xf32>
    %31 = tpu.matmul %29, %30, %cst_15 {dimension_numbers = #tpu.dot_dimension_numbers<[1], [0], [0], [1], [0, 0, 1, 1], [], []>} : vector<2x32xf32>, vector<32x32xf32>, vector<2x32xf32> -> vector<2x32xf32>
    %c0_16 = arith.constant 0 : index
    %c0_17 = arith.constant 0 : index
    %32 = vector.load %arg6[%c0_16, %c0_17] : memref<1x32xf32, #tpu.memory_space<vmem>>, vector<1x32xf32>
    %33 = vector.broadcast %32 : vector<1x32xf32> to vector<2x32xf32>
    %34 = arith.addf %31, %33 : vector<2x32xf32>
    %35 = arith.negf %34 : vector<2x32xf32>
    %36 = math.exp %35 : vector<2x32xf32>
    %cst_18 = arith.constant 1.000000e+00 : f32
    %37 = vector.broadcast %cst_18 : f32 to vector<2x32xf32>
    %38 = arith.addf %37, %36 : vector<2x32xf32>
    %39 = arith.divf %37, %38 : vector<2x32xf32>
    %cst_19 = arith.constant 0.000000e+00 : f32
    %40 = vector.broadcast %cst_19 : f32 to vector<2x32xf32>
    %41 = tpu.concatenate %39, %29, %27, %40 in 1 : vector<2x32xf32>, vector<2x32xf32>, vector<2x32xf32>, vector<2x32xf32> -> vector<2x128xf32>
    %c0_20 = arith.constant 0 : index
    %c0_21 = arith.constant 0 : index
    %42 = vector.load %arg7[%c0_20, %c0_21] : memref<2x128xf32, #tpu.memory_space<vmem>>, vector<2x128xf32>
    tpu.vector_store %arg7[%c0_20, %c0_21], %41 {strides = array<i32>} : memref<2x128xf32, #tpu.memory_space<vmem>>, vector<2x128xf32>,
    return
  }
}

</mosaic_0001>

<llo_original>
// kernel: _lstm_forward.1
$region0: #{_lstm_forward.1}
  #allocation0 [shape = 'u32[]', space=smem, size = 0x4, offset = 0x4, fixed_abs, tag = 'smem constant byte address 0x4 - core index']
  #allocation1 [shape = 'u32[144,128]{1,0:T(1,128)}', space=vmem, size = 0x12000, scoped, tag = 'internal scratch']
  %s0 = inlined_call_operand.hbm [shape: f32[2,16], index: 0, kind: input, shape index: {}]
  %s1 = inlined_call_operand.hbm [shape: f32[2,128], index: 1, kind: input, shape index: {}, may-alias: {1,7}]
  %s2 = inlined_call_operand.hbm [shape: f32[16,128], index: 2, kind: input, shape index: {}]
  %s3 = inlined_call_operand.hbm [shape: f32[32,128], index: 3, kind: input, shape index: {}]
  %s4 = inlined_call_operand.vmem [shape: f32[1,128], index: 4, kind: input, shape index: {}]
  %s5 = inlined_call_operand.hbm [shape: f32[32,32], index: 5, kind: input, shape index: {}]
  %s6 = inlined_call_operand.vmem [shape: f32[1,32], index: 6, kind: input, shape index: {}]
  %s7 = inlined_call_operand.hbm [shape: f32[2,128], index: 7, kind: output, shape index: {}, may-alias: {1,7}]
  %s8 = sld [smem:[#allocation0]]
  $region58: #{_lstm_forward.1} parent=0
    _
  %s10 = ssub.s32 1, %s8
  %s11 = scalar_select 0, %s10, %s8
  $region1: #{_lstm_forward.1} parent=0
    #allocation2 [shape = 'u8[1024]{0}', space=vmem, size = 0x400, scoped, tag = 'input window, operand 0, single buffered']
    #allocation3 [shape = 's32[1]{0}', space=sflag, size = 0x4, scoped, tag = 'scoped memory for _lstm_forward.1']
    #allocation4 [shape = 's32[1]{0}', space=sflag, size = 0x4, scoped, tag = 'scoped memory for _lstm_forward.1']
    #allocation5 [shape = 'u8[1024]{0}', space=vmem, size = 0x400, scoped, tag = 'input window, operand 1, single buffered']
    #allocation6 [shape = 's32[1]{0}', space=sflag, size = 0x4, scoped, tag = 'scoped memory for _lstm_forward.1']
    #allocation7 [shape = 'u8[8192]{0}', space=vmem, size = 0x2000, scoped, tag = 'input window, operand 2, single buffered']
    #allocation8 [shape = 'u8[16384]{0}', space=vmem, size = 0x4000, scoped, tag = 'input window, operand 3, single buffered']
    #allocation9 [shape = 's32[1]{0}', space=sflag, size = 0x4, scoped, tag = 'scoped memory for _lstm_forward.1']
    #allocation10 [shape = 'u8[16384]{0}', space=vmem, size = 0x4000, scoped, tag = 'input window, operand 5, single buffered']
    #allocation11 [shape = 'u8[1024]{0}', space=vmem, size = 0x400, scoped, tag = 'output window, operand 0, single buffered']
    %12 = vsyncpa [#allocation3], 0
    %13 = vsyncpa [#allocation6], 0
    %14 = vsyncpa [#allocation9], 0
    %15 = vsyncpa [#allocation4], 0
    // Predicated region
    $region2: #{_lstm_forward.1} parent=1 // pred_check
      _
    $region3: #{_lstm_forward.1} parent=1 // pred_check_branch
      %17 = sbr.rel (0) target = $region5
    $region4: #{_lstm_forward.1} parent=1 // pred_region
      %s19 = ssub.s32 32, 32
      %20 = vsyncadd [#allocation3], %s19
      %s22 = sshll.u32 [#allocation2], 4
      %s23 = int_to_ptr.vmem [resolvable:$true] %s22
      %25 = dma.hbm_to_vmem [thread:$0]  %s0, 32, %s23, [#allocation3]
    $region5: #{_lstm_forward.1} parent=1 // pred_fallthru
      _
    // Predicated region
    $region6: #{_lstm_forward.1} parent=1 // pred_check
      _
    $region7: #{_lstm_forward.1} parent=1 // pred_check_branch
      %27 = sbr.rel (0) target = $region9
    $region8: #{_lstm_forward.1} parent=1 // pred_region
      %s29 = ssub.s32 32, 32
      %30 = vsyncadd [#allocation6], %s29
      %s32 = sshll.u32 [#allocation5], 4
      %s33 = int_to_ptr.vmem [resolvable:$true] %s32
      %35 = dma.hbm_to_vmem [thread:$0]  %s1, 32, %s33, [#allocation6]
    $region9: #{_lstm_forward.1} parent=1 // pred_fallthru
      _
    // Predicated region
    $region10: #{_lstm_forward.1} parent=1 // pred_check
      _
    $region11: #{_lstm_forward.1} parent=1 // pred_check_branch
      %37 = sbr.rel (0) target = $region13
    $region12: #{_lstm_forward.1} parent=1 // pred_region
      %s39 = ssub.s32 256, 256
      %40 = vsyncadd [#allocation6], %s39
      %s41 = sshll.u32 [#allocation7], 4
      %s42 = int_to_ptr.vmem [resolvable:$true] %s41
      %47 = dma.hbm_to_vmem [thread:$0]  %s2, 256, %s42, [#allocation6], 128, 128, 8
    $region13: #{_lstm_forward.1} parent=1 // pred_fallthru
      _
    // Predicated region
    $region14: #{_lstm_forward.1} parent=1 // pred_check
      _
    $region15: #{_lstm_forward.1} parent=1 // pred_check_branch
      %49 = sbr.rel (0) target = $region17
    $region16: #{_lstm_forward.1} parent=1 // pred_region
      %s51 = ssub.s32 512, 512
      %52 = vsyncadd [#allocation9], %s51
      %s53 = sshll.u32 [#allocation8], 4
      %s54 = int_to_ptr.vmem [resolvable:$true] %s53
      %59 = dma.hbm_to_vmem [thread:$0]  %s3, 512, %s54, [#allocation9], 128, 128, 8
    $region17: #{_lstm_forward.1} parent=1 // pred_fallthru
      _
    // Predicated region
    $region18: #{_lstm_forward.1} parent=1 // pred_check
      _
    $region19: #{_lstm_forward.1} parent=1 // pred_check_branch
      %61 = sbr.rel (0) target = $region21
    $region20: #{_lstm_forward.1} parent=1 // pred_region
      _
    $region21: #{_lstm_forward.1} parent=1 // pred_fallthru
      _
    // Predicated region
    $region22: #{_lstm_forward.1} parent=1 // pred_check
      _
    $region23: #{_lstm_forward.1} parent=1 // pred_check_branch
      %63 = sbr.rel (0) target = $region25
    $region24: #{_lstm_forward.1} parent=1 // pred_region
      %s65 = ssub.s32 512, 512
      %66 = vsyncadd [#allocation9], %s65
      %s67 = sshll.u32 [#allocation10], 4
      %s68 = int_to_ptr.vmem [resolvable:$true] %s67
      %73 = dma.hbm_to_vmem [thread:$0]  %s5, 512, %s68, [#allocation9], 128, 128, 8
    $region25: #{_lstm_forward.1} parent=1 // pred_fallthru
      _
    // Predicated region
    $region26: #{_lstm_forward.1} parent=1 // pred_check
      _
    $region27: #{_lstm_forward.1} parent=1 // pred_check_branch
      %75 = sbr.rel (0) target = $region29
    $region28: #{_lstm_forward.1} parent=1 // pred_region
      _
    $region29: #{_lstm_forward.1} parent=1 // pred_fallthru
      _
    // Predicated region
    $region30: #{_lstm_forward.1} parent=1 // pred_check
      _
    $region31: #{_lstm_forward.1} parent=1 // pred_check_branch
      %77 = sbr.rel (0) target = $region33
    $region32: #{_lstm_forward.1} parent=1 // pred_region
      %78 = dma.done [#allocation3], 32
    $region33: #{_lstm_forward.1} parent=1 // pred_fallthru
      _
    // Predicated region
    $region34: #{_lstm_forward.1} parent=1 // pred_check
      _
    $region35: #{_lstm_forward.1} parent=1 // pred_check_branch
      %80 = sbr.rel (0) target = $region37
    $region36: #{_lstm_forward.1} parent=1 // pred_region
      %81 = dma.done [#allocation6], 32
    $region37: #{_lstm_forward.1} parent=1 // pred_fallthru
      _
    // Predicated region
    $region38: #{_lstm_forward.1} parent=1 // pred_check
      _
    $region39: #{_lstm_forward.1} parent=1 // pred_check_branch
      %83 = sbr.rel (0) target = $region41
    $region40: #{_lstm_forward.1} parent=1 // pred_region
      %84 = dma.done [#allocation6], 256
    $region41: #{_lstm_forward.1} parent=1 // pred_fallthru
      _
    // Predicated region
    $region42: #{_lstm_forward.1} parent=1 // pred_check
      _
    $region43: #{_lstm_forward.1} parent=1 // pred_check_branch
      %86 = sbr.rel (0) target = $region45
    $region44: #{_lstm_forward.1} parent=1 // pred_region
      %87 = dma.done [#allocation9], 512
    $region45: #{_lstm_forward.1} parent=1 // pred_fallthru
      _
    // Predicated region
    $region46: #{_lstm_forward.1} parent=1 // pred_check
      _
    $region47: #{_lstm_forward.1} parent=1 // pred_check_branch
      %89 = sbr.rel (0) target = $region49
    $region48: #{_lstm_forward.1} parent=1 // pred_region
      %90 = dma.done [#allocation9], 512
    $region49: #{_lstm_forward.1} parent=1 // pred_fallthru
      _
    %v91 = vld [vmem:[#allocation2] sm:$0x3]
    %v92 = vld [vmem:[#allocation5] sm:$0x3]
    %v93 = vld [vmem:[#allocation7] sm:$0xff]
    %v94 = vld [vmem:[#allocation7 + $0x8] sm:$0xff]
    %v95 = vld [vmem:[#allocation8] sm:$0xff]
    %v96 = vld [vmem:[#allocation8 + $0x8] sm:$0xff]
    %v97 = vld [vmem:[#allocation8 + $0x10] sm:$0xff]
    %v98 = vld [vmem:[#allocation8 + $0x18] sm:$0xff]
    %100 = vrot.lane.b32.xlu0 %v92, 96
    %v101 = vpop.permute.xlu0 %100
    %vm102 = vcmask 261120
    %v103 = vsel %vm102, %v101, 0
    %105 = vmatprep.subr.mxu0 0.0
    %106 = vmatpush1.msra.mxu0 %v95
    %107 = vmatprep.subr.mxu0 0.0
    %108 = vmatpush1.msra.mxu0 %v96
    %109 = vmatprep.subr.mxu0 0.0
    %110 = vmatpush1.msra.mxu0 %v97
    %111 = vmatprep.subr.mxu0 0.0
    %112 = vmatpush1.msra.mxu0 %v98
    %113 = vmatprep.subr.mxu0 0.0
    %114 = vmatpush1.msra.mxu0 0.0
    %115 = vmatprep.subr.mxu0 0.0
    %116 = vmatpush1.msra.mxu0 0.0
    %117 = vmatprep.subr.mxu0 0.0
    %118 = vmatpush1.msra.mxu0 0.0
    %119 = vmatprep.subr.mxu0 0.0
    %120 = vmatpush1.msra.mxu0 0.0
    %121 = vmatprep.subr.mxu0 0.0
    %122 = vmatpush1.msra.mxu0 0.0
    %123 = vmatprep.subr.mxu0 0.0
    %124 = vmatpush1.msra.mxu0 0.0
    %125 = vmatprep.subr.mxu0 0.0
    %126 = vmatpush1.msra.mxu0 0.0
    %127 = vmatprep.subr.mxu0 0.0
    %128 = vmatpush1.msra.mxu0 0.0
    %129 = vmatprep.subr.mxu0 0.0
    %130 = vmatpush1.msra.mxu0 0.0
    %131 = vmatprep.subr.mxu0 0.0
    %132 = vmatpush1.msra.mxu0 0.0
    %133 = vmatprep.subr.mxu0 0.0
    %134 = vmatpush1.msra.mxu0 0.0
    %135 = vmatprep.subr.mxu0 0.0
    %136 = vmatpush1.msra.mxu0 0.0
    %137 = vmatprep.subr.mxu0 0.0
    %138 = vmatpush1.msra.mxu0 0.0
    %139 = vmatprep.subr.mxu0 0.0
    %140 = vmatpush1.msra.mxu0 0.0
    %141 = vmatprep.subr.mxu0 0.0
    %142 = vmatpush1.msra.mxu0 0.0
    %143 = vmatprep.subr.mxu0 0.0
    %144 = vmatpush1.msra.mxu0 0.0
    %145 = vmatprep.subr.mxu0 0.0
    %146 = vmatpush1.msra.mxu0 0.0
    %147 = vmatprep.subr.mxu0 0.0
    %148 = vmatpush1.msra.mxu0 0.0
    %149 = vmatprep.subr.mxu0 0.0
    %150 = vmatpush1.msra.mxu0 0.0
    %151 = vmatprep.subr.mxu0 0.0
    %152 = vmatpush1.msra.mxu0 0.0
    %153 = vmatprep.subr.mxu0 0.0
    %154 = vmatpush1.msra.mxu0 0.0
    %155 = vmatprep.subr.mxu0 0.0
    %156 = vmatpush1.msra.mxu0 0.0
    %157 = vmatprep.subr.mxu0 0.0
    %158 = vmatpush1.msra.mxu0 0.0
    %159 = vmatprep.subr.mxu0 0.0
    %160 = vmatpush1.msra.mxu0 0.0
    %161 = vmatprep.subr.mxu0 0.0
    %162 = vmatpush1.msra.mxu0 0.0
    %163 = vmatprep.subr.mxu0 0.0
    %164 = vmatpush1.msra.mxu0 0.0
    %165 = vmatprep.subr.mxu0 0.0
    %166 = vmatpush1.msra.mxu0 0.0
    %167 = vmatprep.subr.mxu0 0.0
    %168 = vmatpush1.msra.mxu0 0.0
    %169 = vmatprep.mubr.f32.mxu0 0.0
    %170 = vmatmul.mubr.f32.gmra.mrb[0].mxu0 %v103
    %v171 = vpop.f32.mrb[0].mxu0
    %v172 = vadd.f32 0.0, %v171
    %v173 = vpop.f32.mrb[0].mxu0
    %174 = vdwg.mxu0
    %vm175 = vcmask 130048
    %v177 = vsel %vm175, %v91, 0
    %179 = vmatprep.subr.mxu0 0.0
    %180 = vmatpush1.msra.mxu0 %v93
    %181 = vmatprep.subr.mxu0 0.0
    %182 = vmatpush1.msra.mxu0 %v94
    %183 = vmatprep.subr.mxu0 0.0
    %184 = vmatpush1.msra.mxu0 0.0
    %185 = vmatprep.subr.mxu0 0.0
    %186 = vmatpush1.msra.mxu0 0.0
    %187 = vmatprep.subr.mxu0 0.0
    %188 = vmatpush1.msra.mxu0 0.0
    %189 = vmatprep.subr.mxu0 0.0
    %190 = vmatpush1.msra.mxu0 0.0
    %191 = vmatprep.subr.mxu0 0.0
    %192 = vmatpush1.msra.mxu0 0.0
    %193 = vmatprep.subr.mxu0 0.0
    %194 = vmatpush1.msra.mxu0 0.0
    %195 = vmatprep.subr.mxu0 0.0
    %196 = vmatpush1.msra.mxu0 0.0
    %197 = vmatprep.subr.mxu0 0.0
    %198 = vmatpush1.msra.mxu0 0.0
    %199 = vmatprep.subr.mxu0 0.0
    %200 = vmatpush1.msra.mxu0 0.0
    %201 = vmatprep.subr.mxu0 0.0
    %202 = vmatpush1.msra.mxu0 0.0
    %203 = vmatprep.subr.mxu0 0.0
    %204 = vmatpush1.msra.mxu0 0.0
    %205 = vmatprep.subr.mxu0 0.0
    %206 = vmatpush1.msra.mxu0 0.0
    %207 = vmatprep.subr.mxu0 0.0
    %208 = vmatpush1.msra.mxu0 0.0
    %209 = vmatprep.subr.mxu0 0.0
    %210 = vmatpush1.msra.mxu0 0.0
    %211 = vmatprep.subr.mxu0 0.0
    %212 = vmatpush1.msra.mxu0 0.0
    %213 = vmatprep.subr.mxu0 0.0
    %214 = vmatpush1.msra.mxu0 0.0
    %215 = vmatprep.subr.mxu0 0.0
    %216 = vmatpush1.msra.mxu0 0.0
    %217 = vmatprep.subr.mxu0 0.0
    %218 = vmatpush1.msra.mxu0 0.0
    %219 = vmatprep.subr.mxu0 0.0
    %220 = vmatpush1.msra.mxu0 0.0
    %221 = vmatprep.subr.mxu0 0.0
    %222 = vmatpush1.msra.mxu0 0.0
    %223 = vmatprep.subr.mxu0 0.0
    %224 = vmatpush1.msra.mxu0 0.0
    %225 = vmatprep.subr.mxu0 0.0
    %226 = vmatpush1.msra.mxu0 0.0
    %227 = vmatprep.subr.mxu0 0.0
    %228 = vmatpush1.msra.mxu0 0.0
    %229 = vmatprep.subr.mxu0 0.0
    %230 = vmatpush1.msra.mxu0 0.0
    %231 = vmatprep.subr.mxu0 0.0
    %232 = vmatpush1.msra.mxu0 0.0
    %233 = vmatprep.subr.mxu0 0.0
    %234 = vmatpush1.msra.mxu0 0.0
    %235 = vmatprep.subr.mxu0 0.0
    %236 = vmatpush1.msra.mxu0 0.0
    %237 = vmatprep.subr.mxu0 0.0
    %238 = vmatpush1.msra.mxu0 0.0
    %239 = vmatprep.subr.mxu0 0.0
    %240 = vmatpush1.msra.mxu0 0.0
    %241 = vmatprep.subr.mxu0 0.0
    %242 = vmatpush1.msra.mxu0 0.0
    %243 = vmatprep.mubr.f32.mxu0 0.0
    %244 = vmatmul.mubr.f32.gmra.mrb[0].mxu0 %v177
    %v245 = vpop.f32.mrb[0].mxu0
    %v246 = vadd.f32 %v172, %v245
    %v247 = vpop.f32.mrb[0].mxu0
    %248 = vdwg.mxu0
    %v249 = vld [vmem:[%s4] sm:$0x1]
    %v251 = vlaneseq
    %v252 = vshrl.u32 %v251, 7
    %v253 = vsub.s32 0, %v252
    %v254 = vrot.slane %v249, %v253
    %v256 = vadd.f32 %v246, %v254
    %v257 = vxor.u32 %v256, 2147483648
    %v258 = vmul.f32 %v257, 1.442695
    %v259 = vpow.pop %v258
    %v260 = vadd.f32 %v259, 1.0
    %v261 = vrcp.pop %v260
    %v262 = vmul.f32 1.0, %v261
    %v263 = vmul.f32 %v262, 2.0
    %v264 = vsub.f32 %v263, 1.0
    %v266 = vmul.f32 %v262, %v101
    %268 = vrot.lane.b32.xlu0 %v264, 64
    %v269 = vpop.permute.xlu0 %268
    %v271 = vmul.f32 %v262, %v269
    %273 = vrot.lane.b32.xlu0 %v271, 32
    %v274 = vpop.permute.xlu0 %273
    %v276 = vadd.f32 %v266, %v274
    %v277 = vtanh.pop %v276
    %279 = vrot.lane.b32.xlu0 %v277, 64
    %v280 = vpop.permute.xlu0 %279
    %v282 = vmul.f32 %v262, %v280
    %v283 = vld [vmem:[#allocation10] sm:$0xff]
    %v284 = vld [vmem:[#allocation10 + $0x8] sm:$0xff]
    %v285 = vld [vmem:[#allocation10 + $0x10] sm:$0xff]
    %v286 = vld [vmem:[#allocation10 + $0x18] sm:$0xff]
    %v287 = vld [vmem:[%s6] sm:$0x1]
    %v289 = vlaneseq
    %v290 = vshrl.u32 %v289, 7
    %v291 = vsub.s32 0, %v290
    %v292 = vrot.slane %v287, %v291
    %295 = vrot.lane.b32.xlu0 %v282, 32
    %v296 = vpop.permute.xlu0 %295
    %v297 = vsel %vm102, %v296, 0
    %299 = vmatprep.subr.mxu0 0.0
    %300 = vmatpush1.msra.mxu0 %v283
    %301 = vmatprep.subr.mxu0 0.0
    %302 = vmatpush1.msra.mxu0 %v284
    %303 = vmatprep.subr.mxu0 0.0
    %304 = vmatpush1.msra.mxu0 %v285
    %305 = vmatprep.subr.mxu0 0.0
    %306 = vmatpush1.msra.mxu0 %v286
    %307 = vmatprep.subr.mxu0 0.0
    %308 = vmatpush1.msra.mxu0 0.0
    %309 = vmatprep.subr.mxu0 0.0
    %310 = vmatpush1.msra.mxu0 0.0
    %311 = vmatprep.subr.mxu0 0.0
    %312 = vmatpush1.msra.mxu0 0.0
    %313 = vmatprep.subr.mxu0 0.0
    %314 = vmatpush1.msra.mxu0 0.0
    %315 = vmatprep.subr.mxu0 0.0
    %316 = vmatpush1.msra.mxu0 0.0
    %317 = vmatprep.subr.mxu0 0.0
    %318 = vmatpush1.msra.mxu0 0.0
    %319 = vmatprep.subr.mxu0 0.0
    %320 = vmatpush1.msra.mxu0 0.0
    %321 = vmatprep.subr.mxu0 0.0
    %322 = vmatpush1.msra.mxu0 0.0
    %323 = vmatprep.subr.mxu0 0.0
    %324 = vmatpush1.msra.mxu0 0.0
    %325 = vmatprep.subr.mxu0 0.0
    %326 = vmatpush1.msra.mxu0 0.0
    %327 = vmatprep.subr.mxu0 0.0
    %328 = vmatpush1.msra.mxu0 0.0
    %329 = vmatprep.subr.mxu0 0.0
    %330 = vmatpush1.msra.mxu0 0.0
    %331 = vmatprep.subr.mxu0 0.0
    %332 = vmatpush1.msra.mxu0 0.0
    %333 = vmatprep.subr.mxu0 0.0
    %334 = vmatpush1.msra.mxu0 0.0
    %335 = vmatprep.subr.mxu0 0.0
    %336 = vmatpush1.msra.mxu0 0.0
    %337 = vmatprep.subr.mxu0 0.0
    %338 = vmatpush1.msra.mxu0 0.0
    %339 = vmatprep.subr.mxu0 0.0
    %340 = vmatpush1.msra.mxu0 0.0
    %341 = vmatprep.subr.mxu0 0.0
    %342 = vmatpush1.msra.mxu0 0.0
    %343 = vmatprep.subr.mxu0 0.0
    %344 = vmatpush1.msra.mxu0 0.0
    %345 = vmatprep.subr.mxu0 0.0
    %346 = vmatpush1.msra.mxu0 0.0
    %347 = vmatprep.subr.mxu0 0.0
    %348 = vmatpush1.msra.mxu0 0.0
    %349 = vmatprep.subr.mxu0 0.0
    %350 = vmatpush1.msra.mxu0 0.0
    %351 = vmatprep.subr.mxu0 0.0
    %352 = vmatpush1.msra.mxu0 0.0
    %353 = vmatprep.subr.mxu0 0.0
    %354 = vmatpush1.msra.mxu0 0.0
    %355 = vmatprep.subr.mxu0 0.0
    %356 = vmatpush1.msra.mxu0 0.0
    %357 = vmatprep.subr.mxu0 0.0
    %358 = vmatpush1.msra.mxu0 0.0
    %359 = vmatprep.subr.mxu0 0.0
    %360 = vmatpush1.msra.mxu0 0.0
    %361 = vmatprep.subr.mxu0 0.0
    %362 = vmatpush1.msra.mxu0 0.0
    %363 = vmatprep.mubr.f32.mxu0 0.0
    %364 = vmatmul.mubr.f32.gmra.mrb[0].mxu0 %v297
    %v365 = vpop.f32.mrb[0].mxu0
    %v366 = vadd.f32 %v292, %v365
    %v367 = vpop.f32.mrb[0].mxu0
    %368 = vdwg.mxu0
    %v369 = vxor.u32 %v366, 2147483648
    %v370 = vmul.f32 %v369, 1.442695
    %v371 = vpow.pop %v370
    %v372 = vadd.f32 %v371, 1.0
    %v373 = vrcp.pop %v372
    %v374 = vmul.f32 1.0, %v373
    %375 = vrot.lane.b32.xlu0 %v282, 64
    %v376 = vpop.permute.xlu0 %375
    %379 = vrot.lane.b32.xlu0 %v276, 32
    %v380 = vpop.permute.xlu0 %379
    %v382 = vsel %vm102, %v374, %v376
    %vm383 = vcmask 523264
    %v384 = vsel %vm383, %v382, %v380
    %vm385 = vcmask 785408
    %v386 = vsel %vm385, %v384, 0.0
    %387 = vst [vmem:[#allocation11] sm:$0x3] %v386
    // Predicated region
    $region50: #{_lstm_forward.1} parent=1 // pred_check
      _
    $region51: #{_lstm_forward.1} parent=1 // pred_check_branch
      %389 = sbr.rel (0) target = $region53
    $region52: #{_lstm_forward.1} parent=1 // pred_region
      %s391 = ssub.s32 32, 32
      %392 = vsyncadd [#allocation4], %s391
      %s394 = sshll.u32 [#allocation11], 4
      %s395 = int_to_ptr.vmem [resolvable:$true] %s394
      %397 = dma.vmem_to_hbm [thread:$0]  %s395, 32, %s7, [#allocation4]
    $region53: #{_lstm_forward.1} parent=1 // pred_fallthru
      _
    // Predicated region
    $region54: #{_lstm_forward.1} parent=1 // pred_check
      _
    $region55: #{_lstm_forward.1} parent=1 // pred_check_branch
      %399 = sbr.rel (0) target = $region57
    $region56: #{_lstm_forward.1} parent=1 // pred_region
      %400 = dma.done [#allocation4], 32
    $region57: #{_lstm_forward.1} parent=1 // pred_fallthru
      _
    %401 = vsyncpa [#allocation3], 1
    %402 = vsyncpa [#allocation6], 1
    %403 = vsyncpa [#allocation9], 1
    %404 = vsyncpa [#allocation4], 1

</llo_original>
